<compile_context>
chip_gen: v6e
topology: v6e:2x2x1
jax: 0.10.0
libtpu: 0.0.40
codegen_flags: <defaults>
</compile_context>

<pallas_src>
import functools
import math

import jax
import jax.numpy as jnp
from jax import lax
from jax.experimental import pallas as pl
from jax.experimental.pallas import tpu as pltpu


# ---------------------------------------------------------------------------
# helpers
# ---------------------------------------------------------------------------
def _tile(n, cap, mult):
    """Largest block size <= cap that divides n and is a multiple of `mult`;
    falls back to the full dimension (always a legal block)."""
    if n <= cap:
        return n
    best = None
    t = mult
    while t <= cap:
        if n % t == 0:
            best = t
        t += mult
    return best if best is not None else n


# ---------------------------------------------------------------------------
# LayerNorm kernel
# ---------------------------------------------------------------------------
def _layernorm_kernel(x_ref, g_ref, b_ref, o_ref, *, eps):
    x = x_ref[...].astype(jnp.float32)
    mu = jnp.mean(x, axis=-1, keepdims=True)
    xc = x - mu
    var = jnp.mean(xc * xc, axis=-1, keepdims=True)
    inv = lax.rsqrt(var + eps)
    o_ref[...] = (xc * inv * g_ref[...] + b_ref[...]).astype(o_ref.dtype)


def layer_norm(x, gamma, beta, *, eps=1e-5, tm_cap=512):
    M, D = x.shape
    tm = _tile(M, tm_cap, 8)
    return pl.pallas_call(
        functools.partial(_layernorm_kernel, eps=eps),
        out_shape=jax.ShapeDtypeStruct((M, D), x.dtype),
        grid_spec=pltpu.PrefetchScalarGridSpec(
            num_scalar_prefetch=0,
            grid=(M // tm,),
            in_specs=[pl.BlockSpec((tm, D), lambda i: (i, 0)),
                      pl.BlockSpec((1, D), lambda i: (0, 0)),
                      pl.BlockSpec((1, D), lambda i: (0, 0))],
            out_specs=pl.BlockSpec((tm, D), lambda i: (i, 0))),
        compiler_params=pltpu.CompilerParams(
            dimension_semantics=("parallel",)),
    )(x, gamma.reshape(1, D), beta.reshape(1, D))


# ---------------------------------------------------------------------------
# Linear (matmul + bias, optional fused ReLU / residual add)
# ---------------------------------------------------------------------------
def _make_linear_kernel(activation, add_residual):
    def kernel(*refs):
        if add_residual:
            x_ref, w_ref, b_ref, r_ref, o_ref, acc_ref = refs
        else:
            x_ref, w_ref, b_ref, o_ref, acc_ref = refs
            r_ref = None

        @pl.when(pl.program_id(2) == 0)
        def _():
            acc_ref[...] = jnp.zeros_like(acc_ref)

        acc_ref[...] += jnp.dot(x_ref[...], w_ref[...],
                                preferred_element_type=jnp.float32)

        @pl.when(pl.program_id(2) == pl.num_programs(2) - 1)
        def _():
            y = acc_ref[...] + b_ref[...]
            if activation == "relu":
                y = jnp.maximum(y, 0.0)
            if r_ref is not None:
                y = y + r_ref[...].astype(jnp.float32)
            o_ref[...] = y.astype(o_ref.dtype)

    return kernel


def linear(x, w, b, *, activation=None, residual=None,
           tm_cap=256, tn_cap=512, tk_cap=512):
    M, K = x.shape
    K2, N = w.shape
    assert K == K2
    tm = _tile(M, tm_cap, 8)
    tn = _tile(N, tn_cap, 128)
    tk = _tile(K, tk_cap, 128)
    add_res = residual is not None

    in_specs = [pl.BlockSpec((tm, tk), lambda i, j, k: (i, k)),
                pl.BlockSpec((tk, tn), lambda i, j, k: (k, j)),
                pl.BlockSpec((1, tn), lambda i, j, k: (0, j))]
    args = [x, w, b.reshape(1, N)]
    if add_res:
        in_specs.append(pl.BlockSpec((tm, tn), lambda i, j, k: (i, j)))
        args.append(residual)

    return pl.pallas_call(
        _make_linear_kernel(activation, add_res),
        out_shape=jax.ShapeDtypeStruct((M, N), x.dtype),
        grid_spec=pltpu.PrefetchScalarGridSpec(
            num_scalar_prefetch=0,
            grid=(M // tm, N // tn, K // tk),
            in_specs=in_specs,
            out_specs=pl.BlockSpec((tm, tn), lambda i, j, k: (i, j)),
            scratch_shapes=[pltpu.VMEM((tm, tn), jnp.float32)]),
        compiler_params=pltpu.CompilerParams(
            dimension_semantics=("parallel", "parallel", "arbitrary")),
    )(*args)


# ---------------------------------------------------------------------------
# Multi-head self-attention core: softmax(Q K^T * scale + masks) V
# ---------------------------------------------------------------------------
def _attention_kernel(q_ref, k_ref, v_ref, am_ref, kp_ref, o_ref, *, scale):
    q = q_ref[...].astype(jnp.float32)        # (S, Dh)
    k = k_ref[...].astype(jnp.float32)        # (S, Dh)
    v = v_ref[...].astype(jnp.float32)        # (S, Dh)
    # scores = (q @ k^T) * scale + attn-mask bias + key-padding bias
    s = lax.dot_general(q, k, (((1,), (1,)), ((), ())),
                        preferred_element_type=jnp.float32) * scale
    s = s + am_ref[...] + kp_ref[...]         # (S,S) + (S,S) + (1,S)
    m = jnp.max(s, axis=-1, keepdims=True)
    p = jnp.exp(s - m)
    p = p / jnp.sum(p, axis=-1, keepdims=True)
    o_ref[...] = jnp.dot(p, v, preferred_element_type=jnp.float32).astype(o_ref.dtype)


def multihead_attention(q, k, v, attn_bias, kp_bias, *, scale):
    """q, k, v: (B, H, S, Dh); attn_bias: (S, S); kp_bias: (B, 1, S)."""
    B, H, S, Dh = q.shape

    def qkv_spec():
        return pl.BlockSpec((None, None, S, Dh), lambda b, h: (b, h, 0, 0))

    return pl.pallas_call(
        functools.partial(_attention_kernel, scale=scale),
        out_shape=jax.ShapeDtypeStruct((B, H, S, Dh), q.dtype),
        grid_spec=pltpu.PrefetchScalarGridSpec(
            num_scalar_prefetch=0,
            grid=(B, H),
            in_specs=[qkv_spec(), qkv_spec(), qkv_spec(),
                      pl.BlockSpec((S, S), lambda b, h: (0, 0)),
                      pl.BlockSpec((None, 1, S), lambda b, h: (b, 0, 0))],
            out_specs=pl.BlockSpec((None, None, S, Dh),
                                   lambda b, h: (b, h, 0, 0))),
        compiler_params=pltpu.CompilerParams(
            dimension_semantics=("parallel", "parallel")),
    )(q, k, v, attn_bias, kp_bias)


# ---------------------------------------------------------------------------
# Full encoder-layer forward (wrapper orchestrating the Pallas kernels)
# ---------------------------------------------------------------------------
def transformer_encoder_layer(x, encoder_padding_mask, attn_mask, params):
    """x: (S, B, D) f32; encoder_padding_mask: (B, S) bool (True = pad) or None;
    attn_mask: (S, S) bool (True = masked) or None. Returns (S, B, D)."""
    S, B, D = x.shape
    H = params["num_heads"]
    Dh = D // H

    x2d = x.reshape(S * B, D)

    # ---- self-attention block (pre-norm) ----
    h = layer_norm(x2d, params["ln1_g"], params["ln1_b"])

    # fused QKV projection: one (D, 3D) matmul
    w_qkv = jnp.concatenate([params["wq"], params["wk"], params["wv"]], axis=1)
    b_qkv = jnp.concatenate([params["bq"], params["bk"], params["bv"]], axis=0)
    qkv = linear(h, w_qkv, b_qkv)                                   # (S*B, 3D)

    qkv = qkv.reshape(S, B, 3, H, Dh).transpose(2, 1, 3, 0, 4)      # (3,B,H,S,Dh)
    qh, kh, vh = qkv[0], qkv[1], qkv[2]

    if attn_mask is None:
        attn_bias = jnp.zeros((S, S), jnp.float32)
    else:  # matches torch: masked_fill(bool_mask, -1e8) for fp32
        attn_bias = jnp.where(attn_mask, jnp.float32(-1e8), jnp.float32(0.0))
    if encoder_padding_mask is None:
        kp_bias = jnp.zeros((B, 1, S), jnp.float32)
    else:  # large negative approximates fairseq's -inf on padded keys
        kp_bias = jnp.where(encoder_padding_mask, jnp.float32(-1e9),
                            jnp.float32(0.0)).reshape(B, 1, S)

    attn = multihead_attention(qh, kh, vh, attn_bias, kp_bias,
                               scale=1.0 / math.sqrt(Dh))           # (B,H,S,Dh)
    attn2d = attn.transpose(2, 0, 1, 3).reshape(S * B, D)

    # output projection with fused residual add (dropout = identity at inference)
    x1 = linear(attn2d, params["wo"], params["bo"], residual=x2d)

    # ---- feed-forward block (pre-norm) ----
    h2 = layer_norm(x1, params["ln2_g"], params["ln2_b"])
    f = linear(h2, params["w1"], params["b1"], activation="relu")
    out = linear(f, params["w2"], params["b2"], residual=x1)

    return out.reshape(S, B, D)


# ---------------------------------------------------------------------------
# Pure-JAX reference (transliteration of the PyTorch forward, eval mode)
# ---------------------------------------------------------------------------
def _reference(x, encoder_padding_mask, attn_mask, params):
    S, B, D = x.shape
    H = params["num_heads"]
    Dh = D // H
    P = lax.Precision.HIGHEST

    def ln(z, g, b, eps=1e-5):
        mu = z.mean(-1, keepdims=True)
        var = ((z - mu) ** 2).mean(-1, keepdims=True)
        return (z - mu) / jnp.sqrt(var + eps) * g + b

    residual = x
    h = ln(x, params["ln1_g"], params["ln1_b"])
    q = jnp.dot(h, params["wq"], precision=P) + params["bq"]
    k = jnp.dot(h, params["wk"], precision=P) + params["bk"]
    v = jnp.dot(h, params["wv"], precision=P) + params["bv"]
    q = q * (Dh ** -0.5)

    def heads(t):  # (S,B,D) -> (B,H,S,Dh)
        return t.reshape(S, B, H, Dh).transpose(1, 2, 0, 3)

    qh, kh, vh = heads(q), heads(k), heads(v)
    scores = jnp.einsum("bhqd,bhkd->bhqk", qh, kh, precision=P)
    if attn_mask is not None:
        scores = scores + jnp.where(attn_mask, -1e8, 0.0)[None, None]
    if encoder_padding_mask is not None:
        scores = scores + jnp.where(encoder_padding_mask, -1e9, 0.0)[:, None, None, :]
    probs = jax.nn.softmax(scores, axis=-1)
    attn = jnp.einsum("bhqk,bhkd->bhqd", probs, vh, precision=P)
    attn = attn.transpose(2, 0, 1, 3).reshape(S, B, D)
    attn = jnp.dot(attn, params["wo"], precision=P) + params["bo"]
    x1 = residual + attn

    residual = x1
    h2 = ln(x1, params["ln2_g"], params["ln2_b"])
    f = jnp.maximum(jnp.dot(h2, params["w1"], precision=P) + params["b1"], 0.0)
    f = jnp.dot(f, params["w2"], precision=P) + params["b2"]
    return residual + f


# ---------------------------------------------------------------------------
if __name__ == "__main__":
    S, B, D, H, FF = 8, 2, 32, 4, 64     # seq, batch, embed_dim, heads, ffn_dim

    key = jax.random.PRNGKey(0)
    ks = jax.random.split(key, 18)

    def init(k, shape, scale=0.1):
        return jax.random.normal(k, shape, jnp.float32) * scale

    # weights stored as (in, out), i.e. the transpose of torch nn.Linear.weight
    params = {
        "num_heads": H,
        "ln1_g": 1.0 + init(ks[0], (D,), 0.05),
        "ln1_b": init(ks[1], (D,), 0.05),
        "wq": init(ks[2], (D, D)), "bq": init(ks[3], (D,)),
        "wk": init(ks[4], (D, D)), "bk": init(ks[5], (D,)),
        "wv": init(ks[6], (D, D)), "bv": init(ks[7], (D,)),
        "wo": init(ks[8], (D, D)), "bo": init(ks[9], (D,)),
        "ln2_g": 1.0 + init(ks[10], (D,), 0.05),
        "ln2_b": init(ks[11], (D,), 0.05),
        "w1": init(ks[12], (D, FF)), "b1": init(ks[13], (FF,)),
        "w2": init(ks[14], (FF, D)), "b2": init(ks[15], (D,)),
    }

    x = jax.random.normal(ks[16], (S, B, D), jnp.float32)
    # last two positions of batch 1 are padding
    encoder_padding_mask = jnp.zeros((B, S), bool).at[1, S - 2:].set(True)
    # strided/causal-style attention mask: True = exclude
    attn_mask = jnp.triu(jnp.ones((S, S), jnp.int32), k=1).astype(bool)

    out = transformer_encoder_layer(x, encoder_padding_mask, attn_mask, params)
    out = jax.block_until_ready(out)

    ref = _reference(x, encoder_padding_mask, attn_mask, params)
    assert out.shape == (S, B, D)
    err = float(jnp.max(jnp.abs(out - ref)))
    assert jnp.allclose(out, ref, atol=1e-2, rtol=1e-2), f"max abs error {err}"

    print("KERNEL_OK")
</pallas_src>

<mosaic_0001>
module attributes {stable_mosaic.version = 11 : i64} {
  func.func @_layernorm_kernel(%arg0: i32, %arg1: memref<16x32xf32, #tpu.memory_space<vmem>>, %arg2: memref<1x32xf32, #tpu.memory_space<vmem>>, %arg3: memref<1x32xf32, #tpu.memory_space<vmem>>, %arg4: memref<16x32xf32, #tpu.memory_space<vmem>>) attributes {dimension_semantics = [#tpu.dimension_semantics<parallel>], iteration_bounds = array<i64: 1>, scalar_prefetch = 0 : i64, scratch_operands = 0 : i64, tpu.core_type = #tpu.core_type<tc>, window_params = [{transform_indices = @transform_0, window_bounds = array<i64: 16, 32>}, {pipeline_mode = #tpu.pipeline_mode<synchronous>, transform_indices = @transform_1, window_bounds = array<i64: 1, 32>}, {pipeline_mode = #tpu.pipeline_mode<synchronous>, transform_indices = @transform_2, window_bounds = array<i64: 1, 32>}, {transform_indices = @transform_3, window_bounds = array<i64: 16, 32>}]} {
    %c0 = arith.constant 0 : index
    %c0_0 = arith.constant 0 : index
    %0 = vector.load %arg1[%c0, %c0_0] : memref<16x32xf32, #tpu.memory_space<vmem>>, vector<16x32xf32>
    %cst = arith.constant dense<0.000000e+00> : vector<16xf32>
    %1 = vector.multi_reduction <add>, %0, %cst [1] : vector<16x32xf32> to vector<16xf32>
    %2 = vector.shape_cast %1 : vector<16xf32> to vector<16x1xf32>
    %cst_1 = arith.constant 3.200000e+01 : f32
    %3 = vector.broadcast %cst_1 : f32 to vector<16x1xf32>
    %4 = arith.divf %2, %3 : vector<16x1xf32>
    %5 = vector.broadcast %4 : vector<16x1xf32> to vector<16x32xf32>
    %6 = arith.subf %0, %5 : vector<16x32xf32>
    %7 = arith.mulf %6, %6 : vector<16x32xf32>
    %cst_2 = arith.constant dense<0.000000e+00> : vector<16xf32>
    %8 = vector.multi_reduction <add>, %7, %cst_2 [1] : vector<16x32xf32> to vector<16xf32>
    %9 = vector.shape_cast %8 : vector<16xf32> to vector<16x1xf32>
    %cst_3 = arith.constant 3.200000e+01 : f32
    %10 = vector.broadcast %cst_3 : f32 to vector<16x1xf32>
    %11 = arith.divf %9, %10 : vector<16x1xf32>
    %cst_4 = arith.constant 9.99999974E-6 : f32
    %12 = vector.broadcast %cst_4 : f32 to vector<16x1xf32>
    %13 = arith.addf %11, %12 : vector<16x1xf32>
    %14 = math.rsqrt %13 : vector<16x1xf32>
    %15 = vector.broadcast %14 : vector<16x1xf32> to vector<16x32xf32>
    %16 = arith.mulf %6, %15 : vector<16x32xf32>
    %c0_5 = arith.constant 0 : index
    %c0_6 = arith.constant 0 : index
    %17 = vector.load %arg2[%c0_5, %c0_6] : memref<1x32xf32, #tpu.memory_space<vmem>>, vector<1x32xf32>
    %18 = vector.broadcast %17 : vector<1x32xf32> to vector<16x32xf32>
    %19 = arith.mulf %16, %18 : vector<16x32xf32>
    %c0_7 = arith.constant 0 : index
    %c0_8 = arith.constant 0 : index
    %20 = vector.load %arg3[%c0_7, %c0_8] : memref<1x32xf32, #tpu.memory_space<vmem>>, vector<1x32xf32>
    %21 = vector.broadcast %20 : vector<1x32xf32> to vector<16x32xf32>
    %22 = arith.addf %19, %21 : vector<16x32xf32>
    %c0_9 = arith.constant 0 : index
    %c0_10 = arith.constant 0 : index
    %23 = vector.load %arg4[%c0_9, %c0_10] : memref<16x32xf32, #tpu.memory_space<vmem>>, vector<16x32xf32>
    tpu.vector_store %arg4[%c0_9, %c0_10], %22 {strides = array<i32>} : memref<16x32xf32, #tpu.memory_space<vmem>>, vector<16x32xf32>,
    return
  }
  func.func @transform_0(%arg0: i32) -> (i32, i32) {
    %c0_i32 = arith.constant 0 : i32
    %c0_i32_0 = arith.constant 0 : i32
    return %arg0, %c0_i32 : i32, i32
  }
  func.func @transform_1(%arg0: i32) -> (i32, i32) {
    %c0_i32 = arith.constant 0 : i32
    %c0_i32_0 = arith.constant 0 : i32
    %c0_i32_1 = arith.constant 0 : i32
    return %c0_i32, %c0_i32_0 : i32, i32
  }
  func.func @transform_2(%arg0: i32) -> (i32, i32) {
    %c0_i32 = arith.constant 0 : i32
    %c0_i32_0 = arith.constant 0 : i32
    %c0_i32_1 = arith.constant 0 : i32
    return %c0_i32, %c0_i32_0 : i32, i32
  }
  func.func @transform_3(%arg0: i32) -> (i32, i32) {
    %c0_i32 = arith.constant 0 : i32
    %c0_i32_0 = arith.constant 0 : i32
    return %arg0, %c0_i32 : i32, i32
  }
}

</mosaic_0001>

<llo_original>
// kernel: tpu_custom_call.1
$region0: #{tpu_custom_call.1}
  #allocation0 [shape = 'u32[]', space=smem, size = 0x4, offset = 0x4, fixed_abs, tag = 'smem constant byte address 0x4 - core index']
  #allocation1 [shape = 'u32[144,128]{1,0:T(1,128)}', space=vmem, size = 0x12000, scoped, tag = 'internal scratch']
  %s0 = inlined_call_operand.hbm [shape: f32[16,32], index: 0, kind: input, shape index: {}]
  %s1 = inlined_call_operand.vmem [shape: f32[1,32], index: 1, kind: input, shape index: {}]
  %s2 = inlined_call_operand.vmem [shape: f32[1,32], index: 2, kind: input, shape index: {}]
  %s3 = inlined_call_operand.hbm [shape: f32[16,32], index: 3, kind: output, shape index: {}]
  %s4 = sld [smem:[#allocation0]]
  $region26: #{tpu_custom_call.1} parent=0
    _
  %s6 = ssub.s32 1, %s4
  %s7 = scalar_select 0, %s6, %s4
  $region1: #{tpu_custom_call.1} parent=0
    #allocation2 [shape = 'u8[8192]{0}', space=vmem, size = 0x2000, scoped, tag = 'input window, operand 0, single buffered']
    #allocation3 [shape = 's32[1]{0}', space=sflag, size = 0x4, scoped, tag = 'scoped memory for tpu_custom_call.1']
    #allocation4 [shape = 's32[1]{0}', space=sflag, size = 0x4, scoped, tag = 'scoped memory for tpu_custom_call.1']
    #allocation5 [shape = 'u8[8192]{0}', space=vmem, size = 0x2000, scoped, tag = 'output window, operand 0, single buffered']
    %8 = vsyncpa [#allocation3], 0
    %9 = vsyncpa [#allocation4], 0
    // Predicated region
    $region2: #{tpu_custom_call.1} parent=1 // pred_check
      _
    $region3: #{tpu_custom_call.1} parent=1 // pred_check_branch
      %11 = sbr.rel (0) target = $region5
    $region4: #{tpu_custom_call.1} parent=1 // pred_region
      %s13 = ssub.s32 256, 256
      %14 = vsyncadd [#allocation3], %s13
      %s15 = sshll.u32 [#allocation2], 4
      %s16 = int_to_ptr.vmem [resolvable:$true] %s15
      %21 = dma.hbm_to_vmem [thread:$0]  %s0, 256, %s16, [#allocation3], 128, 128, 8
    $region5: #{tpu_custom_call.1} parent=1 // pred_fallthru
      _
    // Predicated region
    $region6: #{tpu_custom_call.1} parent=1 // pred_check
      _
    $region7: #{tpu_custom_call.1} parent=1 // pred_check_branch
      %23 = sbr.rel (0) target = $region9
    $region8: #{tpu_custom_call.1} parent=1 // pred_region
      _
    $region9: #{tpu_custom_call.1} parent=1 // pred_fallthru
      _
    // Predicated region
    $region10: #{tpu_custom_call.1} parent=1 // pred_check
      _
    $region11: #{tpu_custom_call.1} parent=1 // pred_check_branch
      %25 = sbr.rel (0) target = $region13
    $region12: #{tpu_custom_call.1} parent=1 // pred_region
      _
    $region13: #{tpu_custom_call.1} parent=1 // pred_fallthru
      _
    // Predicated region
    $region14: #{tpu_custom_call.1} parent=1 // pred_check
      _
    $region15: #{tpu_custom_call.1} parent=1 // pred_check_branch
      %27 = sbr.rel (0) target = $region17
    $region16: #{tpu_custom_call.1} parent=1 // pred_region
      %28 = dma.done [#allocation3], 256
    $region17: #{tpu_custom_call.1} parent=1 // pred_fallthru
      _
    %v29 = vld [vmem:[#allocation2] sm:$0xff]
    %v30 = vld [vmem:[#allocation2 + $0x8] sm:$0xff]
    %vm31 = vcmask 261120
    %v32 = vsel %vm31, %v29, 0.0
    %33 = vadd.xlane.f32.xlu0 %v32
    %v34 = vpop.xlane.xlu0 %33
    %v35 = vsel %vm31, %v30, 0.0
    %36 = vadd.xlane.f32.xlu0 %v35
    %v37 = vpop.xlane.xlu0 %36
    %v38 = vrcp.pop 32.0
    %v39 = vmul.f32 %v34, %v38
    %v40 = vmul.f32 %v37, %v38
    %v41 = vsub.f32 %v29, %v39
    %v42 = vsub.f32 %v30, %v40
    %v43 = vmul.f32 %v41, %v41
    %v44 = vmul.f32 %v42, %v42
    %v45 = vsel %vm31, %v43, 0.0
    %46 = vadd.xlane.f32.xlu0 %v45
    %v47 = vpop.xlane.xlu0 %46
    %v48 = vsel %vm31, %v44, 0.0
    %49 = vadd.xlane.f32.xlu0 %v48
    %v50 = vpop.xlane.xlu0 %49
    %v51 = vmul.f32 %v47, %v38
    %v52 = vmul.f32 %v50, %v38
    %v53 = vadd.f32 %v51, 1e-05
    %v54 = vadd.f32 %v52, 1e-05
    %v55 = vrsqrt.pop %v53
    %v56 = vrsqrt.pop %v54
    %v57 = vmul.f32 %v41, %v55
    %v58 = vmul.f32 %v42, %v56
    %v59 = vld [vmem:[%s1] sm:$0x1]
    %v61 = vlaneseq
    %v62 = vshrl.u32 %v61, 7
    %v63 = vsub.s32 0, %v62
    %v64 = vrot.slane %v59, %v63
    %v66 = vmul.f32 %v57, %v64
    %v67 = vmul.f32 %v58, %v64
    %v68 = vld [vmem:[%s2] sm:$0x1]
    %v70 = vlaneseq
    %v71 = vshrl.u32 %v70, 7
    %v72 = vsub.s32 0, %v71
    %v73 = vrot.slane %v68, %v72
    %v75 = vadd.f32 %v66, %v73
    %v76 = vadd.f32 %v67, %v73
    %77 = vst.msk [vmem:[#allocation5] sm:$0xff] %vm31, %v75
    %78 = vst.msk [vmem:[#allocation5 + $0x8] sm:$0xff] %vm31, %v76
    // Predicated region
    $region18: #{tpu_custom_call.1} parent=1 // pred_check
      _
    $region19: #{tpu_custom_call.1} parent=1 // pred_check_branch
      %80 = sbr.rel (0) target = $region21
    $region20: #{tpu_custom_call.1} parent=1 // pred_region
      %s82 = ssub.s32 256, 256
      %83 = vsyncadd [#allocation4], %s82
      %s84 = sshll.u32 [#allocation5], 4
      %s85 = int_to_ptr.vmem [resolvable:$true] %s84
      %90 = dma.vmem_to_hbm [thread:$0]  %s85, 256, %s3, [#allocation4], 128, 128, 8
    $region21: #{tpu_custom_call.1} parent=1 // pred_fallthru
      _
    // Predicated region
    $region22: #{tpu_custom_call.1} parent=1 // pred_check
      _
    $region23: #{tpu_custom_call.1} parent=1 // pred_check_branch
      %92 = sbr.rel (0) target = $region25
    $region24: #{tpu_custom_call.1} parent=1 // pred_region
      %93 = dma.done [#allocation4], 256
    $region25: #{tpu_custom_call.1} parent=1 // pred_fallthru
      _
    %94 = vsyncpa [#allocation3], 1
    %95 = vsyncpa [#allocation4], 1

</llo_original>
